<compile_context>
chip_gen: v5e
topology: v5e:2x2
jax: 0.10.0
libtpu: 0.0.40
codegen_flags: <defaults>
</compile_context>

<pallas_src>
import functools

import jax
import jax.numpy as jnp
from jax.experimental import pallas as pl
from jax.experimental.pallas import tpu as pltpu

NUM_CORES = 2  # outer "parallel" grid axis; no-op on 1-TC chips (v5e/v6e)


def _triplet_loss_kernel(a_ref, p_ref, n_ref, o_ref, *,
                         margin: float, batch_size: int, block_rows: int,
                         tiles_per_core: int, need_mask: bool):
    c = pl.program_id(0)   # core (parallel)
    i = pl.program_id(1)   # tile within core (arbitrary / reduction)

    # Zero this core's resident (8, 128) accumulator block on its first tile.
    @pl.when(i == 0)
    def _init():
        o_ref[...] = jnp.zeros_like(o_ref)

    # Stream native-dtype tiles, upcast to f32 in-register for the math
    # (f32 kept deliberately: bf16 subtraction loses mantissa when a ~= p).
    a = a_ref[...].astype(jnp.float32)
    p = p_ref[...].astype(jnp.float32)
    n = n_ref[...].astype(jnp.float32)

    # Fused distance difference (one reduction tree instead of two):
    #   dist_pos - dist_neg = sum((a-p)^2 - (a-n)^2)
    #                       = sum(((a-p)-(a-n)) * ((a-p)+(a-n)))
    #                       = sum((n-p) * (2a - p - n))
    u = n - p
    v = (a - p) + (a - n)
    ddiff = jnp.sum(u * v, axis=1, keepdims=True)               # (TB, 1)

    # MarginRankingLoss(dist_neg, dist_pos, target=1):
    #   max(0, -(dist_neg - dist_pos) + margin) = max(0, dist_pos - dist_neg + margin)
    hinge = jnp.maximum(ddiff + jnp.float32(margin), 0.0)        # (TB, 1)

    # Mask rows past the true batch size (ragged last tile and/or grid points
    # whose block index was clamped in the index_map).
    if need_mask:
        row = (c * tiles_per_core + i) * block_rows + jax.lax.broadcasted_iota(
            jnp.int32, (block_rows, 1), 0)
        hinge = jnp.where(row < batch_size, hinge, 0.0)

    # Accumulate this tile's partial hinge sum into the core's resident block
    # ((1,1) broadcast over the (8,128) block; wrapper reads lane/sublane 0).
    o_ref[...] += jnp.sum(hinge, axis=0, keepdims=True)


def _choose_block_rows(batch: int, feat: int, itemsize: int):
    """Pick a batch-tile size and VMEM limit, generation-aware.

    Budget accounts for 3 double-buffered native-dtype input tiles plus the
    f32 temporaries the kernel creates per row (a/p/n upcasts, u, v, u*v).
    """
    try:
        vmem_cap = pltpu.get_tpu_info().vmem_capacity_bytes
    except Exception:
        vmem_cap = 64 * 1024 * 1024                      # conservative (v7x)
    vmem_limit = min((vmem_cap * 3) // 4, 96 * 1024 * 1024)
    budget = vmem_limit // 2                             # ~50% headroom

    # Sublane multiple: 8 for f32, 16 for bf16, 32 for int8/fp8 (packed).
    sublane_mult = max(8, 8 * (4 // max(itemsize, 1)))
    bytes_per_row = 3 * 2 * feat * itemsize + 6 * feat * 4
    tb = budget // max(bytes_per_row, 1)
    tb = min(tb, 32768)                                  # was 4096; raised per review
    tb = max(sublane_mult, (tb // sublane_mult) * sublane_mult)
    if tb >= batch:
        tb = batch                                       # single block covers batch
    return tb, vmem_limit


def triplet_loss(anchor, positive, negative, margin: float = 0.3):
    """anchor/positive/negative: (B, D) arrays (any float dtype). Returns scalar f32."""
    assert anchor.shape == positive.shape == negative.shape
    B, D = anchor.shape
    tb, vmem_limit = _choose_block_rows(B, D, anchor.dtype.itemsize)

    num_blocks = pl.cdiv(B, tb)
    tiles_per_core = pl.cdiv(num_blocks, NUM_CORES)
    need_mask = (NUM_CORES * tiles_per_core * tb != B)

    def in_map(c, i):
        blk = c * tiles_per_core + i
        # Clamp overflow grid points to the last valid block; their rows are
        # >= B so the in-kernel mask zeroes their contribution.
        return (jnp.minimum(blk, num_blocks - 1), 0)

    in_spec = pl.BlockSpec((tb, D), in_map)
    out_spec = pl.BlockSpec((8, 128), lambda c, i: (c, 0))   # per-core block

    kernel = functools.partial(
        _triplet_loss_kernel,
        margin=float(margin), batch_size=B, block_rows=tb,
        tiles_per_core=tiles_per_core, need_mask=need_mask)

    out = pl.pallas_call(
        kernel,
        out_shape=jax.ShapeDtypeStruct((NUM_CORES * 8, 128), jnp.float32),
        grid=(NUM_CORES, tiles_per_core),
        in_specs=[in_spec, in_spec, in_spec],
        out_specs=out_spec,
        compiler_params=pltpu.CompilerParams(
            dimension_semantics=("parallel", "arbitrary"),
            vmem_limit_bytes=int(vmem_limit)),
    )(anchor, positive, negative)

    per_core = out[0::8, 0]                 # (NUM_CORES,) per-core partial sums
    return jnp.sum(per_core) / jnp.float32(B)


def triplet_loss_ref(anchor, positive, negative, margin: float = 0.3):
    """Pure-JAX reference for validation."""
    a = anchor.astype(jnp.float32)
    p = positive.astype(jnp.float32)
    n = negative.astype(jnp.float32)
    dist_pos = jnp.sum((a - p) ** 2, axis=1)
    dist_neg = jnp.sum((a - n) ** 2, axis=1)
    return jnp.mean(jnp.maximum(dist_pos - dist_neg + margin, 0.0))


if __name__ == "__main__":
    key = jax.random.PRNGKey(0)
    k_a, k_p, k_n = jax.random.split(key, 3)

    B, D = 8, 32  # small batch of embedding triplets
    anchor = jax.random.normal(k_a, (B, D), dtype=jnp.float32)
    positive = jax.random.normal(k_p, (B, D), dtype=jnp.float32)
    negative = jax.random.normal(k_n, (B, D), dtype=jnp.float32)

    loss = triplet_loss(anchor, positive, negative, margin=0.3)
    jax.block_until_ready(loss)

    ref = triplet_loss_ref(anchor, positive, negative, margin=0.3)
    assert jnp.allclose(loss, ref, rtol=1e-4, atol=1e-5), (loss, ref)

    print("KERNEL_OK")
</pallas_src>

<mosaic_0001>
module attributes {stable_mosaic.version = 11 : i64} {
  func.func @_triplet_loss_kernel(%arg0: i32, %arg1: i32, %arg2: memref<8x32xf32, #tpu.memory_space<vmem>>, %arg3: memref<8x32xf32, #tpu.memory_space<vmem>>, %arg4: memref<8x32xf32, #tpu.memory_space<vmem>>, %arg5: memref<8x128xf32, #tpu.memory_space<vmem>>) attributes {dimension_semantics = [#tpu.dimension_semantics<parallel>, #tpu.dimension_semantics<arbitrary>], iteration_bounds = array<i64: 2, 1>, scalar_prefetch = 0 : i64, scratch_operands = 0 : i64, tpu.core_type = #tpu.core_type<tc>, window_params = [{transform_indices = @transform_0, window_bounds = array<i64: 8, 32>}, {transform_indices = @transform_1, window_bounds = array<i64: 8, 32>}, {transform_indices = @transform_2, window_bounds = array<i64: 8, 32>}, {transform_indices = @transform_3, window_bounds = array<i64: 8, 128>}]} {
    %c0_i32 = arith.constant 0 : i32
    %0 = arith.cmpi eq, %arg1, %c0_i32 : i32
    %1 = arith.extui %0 : i1 to i32
    %c0_i32_0 = arith.constant 0 : i32
    %2 = arith.cmpi ne, %1, %c0_i32_0 : i32
    scf.if %2 {
      %cst_15 = arith.constant 0.000000e+00 : f32
      %33 = vector.broadcast %cst_15 : f32 to vector<8x128xf32>
      %c0_16 = arith.constant 0 : index
      %c0_17 = arith.constant 0 : index
      %34 = vector.load %arg5[%c0_16, %c0_17] : memref<8x128xf32, #tpu.memory_space<vmem>>, vector<8x128xf32>
      tpu.vector_store %arg5[%c0_16, %c0_17], %33 {strides = array<i32>} : memref<8x128xf32, #tpu.memory_space<vmem>>, vector<8x128xf32>,
    } else {
    }
    %c0 = arith.constant 0 : index
    %c0_1 = arith.constant 0 : index
    %3 = vector.load %arg2[%c0, %c0_1] : memref<8x32xf32, #tpu.memory_space<vmem>>, vector<8x32xf32>
    %c0_2 = arith.constant 0 : index
    %c0_3 = arith.constant 0 : index
    %4 = vector.load %arg3[%c0_2, %c0_3] : memref<8x32xf32, #tpu.memory_space<vmem>>, vector<8x32xf32>
    %c0_4 = arith.constant 0 : index
    %c0_5 = arith.constant 0 : index
    %5 = vector.load %arg4[%c0_4, %c0_5] : memref<8x32xf32, #tpu.memory_space<vmem>>, vector<8x32xf32>
    %6 = arith.subf %5, %4 : vector<8x32xf32>
    %7 = arith.subf %3, %4 : vector<8x32xf32>
    %8 = arith.subf %3, %5 : vector<8x32xf32>
    %9 = arith.addf %7, %8 : vector<8x32xf32>
    %10 = arith.mulf %6, %9 : vector<8x32xf32>
    %cst = arith.constant dense<0.000000e+00> : vector<8xf32>
    %11 = vector.multi_reduction <add>, %10, %cst [1] : vector<8x32xf32> to vector<8xf32>
    %12 = vector.shape_cast %11 : vector<8xf32> to vector<8x1xf32>
    %cst_6 = arith.constant 3.000000e-01 : f32
    %13 = vector.broadcast %cst_6 : f32 to vector<8x1xf32>
    %14 = arith.addf %12, %13 : vector<8x1xf32>
    %cst_7 = arith.constant 0.000000e+00 : f32
    %15 = vector.broadcast %cst_7 : f32 to vector<8x1xf32>
    %16 = arith.maximumf %14, %15 : vector<8x1xf32>
    %c1_i32 = arith.constant 1 : i32
    %17 = arith.muli %arg0, %c1_i32 : i32
    %18 = arith.addi %17, %arg1 : i32
    %c8_i32 = arith.constant 8 : i32
    %19 = arith.muli %18, %c8_i32 : i32
    %20 = tpu.iota {dimensions = array<i32: 0>} : vector<8x1xi32>
    %21 = vector.broadcast %19 : i32 to vector<8x1xi32>
    %22 = arith.addi %21, %20 : vector<8x1xi32>
    %c8_i32_8 = arith.constant 8 : i32
    %23 = vector.broadcast %c8_i32_8 : i32 to vector<8x1xi32>
    %24 = arith.cmpi slt, %22, %23 : vector<8x1xi32>
    %cst_9 = arith.constant 0.000000e+00 : f32
    %25 = vector.broadcast %cst_9 : f32 to vector<8x1xf32>
    %26 = arith.select %24, %16, %25 : vector<8x1xi1>, vector<8x1xf32>
    %c0_10 = arith.constant 0 : index
    %c0_11 = arith.constant 0 : index
    %27 = vector.load %arg5[%c0_10, %c0_11] : memref<8x128xf32, #tpu.memory_space<vmem>>, vector<8x128xf32>
    %cst_12 = arith.constant dense<0.000000e+00> : vector<1xf32>
    %28 = vector.multi_reduction <add>, %26, %cst_12 [0] : vector<8x1xf32> to vector<1xf32>
    %29 = vector.shape_cast %28 : vector<1xf32> to vector<1x1xf32>
    %30 = vector.broadcast %29 : vector<1x1xf32> to vector<8x128xf32>
    %31 = arith.addf %27, %30 : vector<8x128xf32>
    %c0_13 = arith.constant 0 : index
    %c0_14 = arith.constant 0 : index
    %32 = vector.load %arg5[%c0_13, %c0_14] : memref<8x128xf32, #tpu.memory_space<vmem>>, vector<8x128xf32>
    tpu.vector_store %arg5[%c0_13, %c0_14], %31 {strides = array<i32>} : memref<8x128xf32, #tpu.memory_space<vmem>>, vector<8x128xf32>,
    return
  }
  func.func @transform_0(%arg0: i32, %arg1: i32) -> (i32, i32) {
    %c1_i32 = arith.constant 1 : i32
    %0 = arith.muli %arg0, %c1_i32 : i32
    %1 = arith.addi %0, %arg1 : i32
    %c0_i32 = arith.constant 0 : i32
    %2 = arith.minsi %1, %c0_i32 : i32
    %c0_i32_0 = arith.constant 0 : i32
    %c0_i32_1 = arith.constant 0 : i32
    return %2, %c0_i32_0 : i32, i32
  }
  func.func @transform_1(%arg0: i32, %arg1: i32) -> (i32, i32) {
    %c1_i32 = arith.constant 1 : i32
    %0 = arith.muli %arg0, %c1_i32 : i32
    %1 = arith.addi %0, %arg1 : i32
    %c0_i32 = arith.constant 0 : i32
    %2 = arith.minsi %1, %c0_i32 : i32
    %c0_i32_0 = arith.constant 0 : i32
    %c0_i32_1 = arith.constant 0 : i32
    return %2, %c0_i32_0 : i32, i32
  }
  func.func @transform_2(%arg0: i32, %arg1: i32) -> (i32, i32) {
    %c1_i32 = arith.constant 1 : i32
    %0 = arith.muli %arg0, %c1_i32 : i32
    %1 = arith.addi %0, %arg1 : i32
    %c0_i32 = arith.constant 0 : i32
    %2 = arith.minsi %1, %c0_i32 : i32
    %c0_i32_0 = arith.constant 0 : i32
    %c0_i32_1 = arith.constant 0 : i32
    return %2, %c0_i32_0 : i32, i32
  }
  func.func @transform_3(%arg0: i32, %arg1: i32) -> (i32, i32) {
    %c0_i32 = arith.constant 0 : i32
    %c0_i32_0 = arith.constant 0 : i32
    return %arg0, %c0_i32 : i32, i32
  }
}

</mosaic_0001>

<llo_original>
// kernel: tpu_custom_call.1
$region0: #{tpu_custom_call.1}
  #allocation0 [shape = 'u32[]', space=smem, size = 0x4, offset = 0x4, fixed_abs, tag = 'smem constant byte address 0x4 - core index']
  #allocation1 [shape = 'u32[72,128]{1,0:T(1,128)}', space=vmem, size = 0x9000, scoped, tag = 'internal scratch']
  %s0 = inlined_call_operand.hbm [shape: f32[8,32], index: 0, kind: input, shape index: {}]
  %s1 = inlined_call_operand.hbm [shape: f32[8,32], index: 1, kind: input, shape index: {}]
  %s2 = inlined_call_operand.hbm [shape: f32[8,32], index: 2, kind: input, shape index: {}]
  %s3 = inlined_call_operand.hbm [shape: f32[16,128], index: 3, kind: output, shape index: {}]
  %s4 = sld [smem:[#allocation0]]
  $region61: #{tpu_custom_call.1} parent=0
    _
  %s6 = ssub.s32 1, %s4
  %s7 = scalar_select 0, %s6, %s4
  $region1: #{tpu_custom_call.1} parent=0
    #allocation2 [shape = 'u8[8192]{0}', space=vmem, size = 0x2000, scoped, tag = 'input window, operand 0']
    #allocation3 [shape = 's32[2]{0}', space=sflag, size = 0x8, scoped, tag = 'scoped memory for tpu_custom_call.1']
    #allocation4 [shape = 's32[2]{0}', space=sflag, size = 0x8, scoped, tag = 'scoped memory for tpu_custom_call.1']
    #allocation5 [shape = 'u8[8192]{0}', space=vmem, size = 0x2000, scoped, tag = 'input window, operand 1']
    #allocation6 [shape = 's32[2]{0}', space=sflag, size = 0x8, scoped, tag = 'scoped memory for tpu_custom_call.1']
    #allocation7 [shape = 'u8[8192]{0}', space=vmem, size = 0x2000, scoped, tag = 'input window, operand 2']
    #allocation8 [shape = 'u8[8192]{0}', space=vmem, size = 0x2000, scoped, tag = 'output window, operand 0']
    %8 = vsyncpa [#allocation3], 0
    %s9 = scalar_lea.sflag [#allocation3], 1
    %10 = vsyncpa %s9, 0
    %11 = vsyncpa [#allocation6], 0
    %s12 = scalar_lea.sflag [#allocation6], 1
    %13 = vsyncpa %s12, 0
    %14 = vsyncpa [#allocation4], 0
    %s15 = scalar_lea.sflag [#allocation4], 1
    %16 = vsyncpa %s15, 0
    loop: start=0, step=1, limit=4
    $region2: #{tpu_custom_call.1} parent=1 // loop_pre_header
      _
    $region3: #{tpu_custom_call.1} parent=1 // loop_header
      %s18 = sphi 0, %s22
      %p19 = scmp.ge.s32.totalorder %s18, 4
      %s25 = sphi 0, %s37
      %s26 = sphi 0, %s33
      %s27 = sphi 0, %s25
      %s28 = sphi 0, %s26
      %s29 = sphi 0, %s27
      %s30 = sphi 0, %s28
      %s46 = sphi 0, %s48
      %s49 = sphi 0, %s46
      %s50 = sphi 0, %s49
      %s66 = sphi 0, %s50
      %s78 = sphi 0, %s80
      %s81 = sphi 0, %s78
      %s82 = sphi 0, %s81
      %s98 = sphi 0, %s82
      %s110 = sphi 0, %s112
      %s113 = sphi 0, %s110
      %s114 = sphi 0, %s113
      %s130 = sphi 0, %s114
      %s136 = sphi 0, %s138
      %s139 = sphi 0, %s136
      %s140 = sphi 0, %s139
      %s156 = sphi 0, %s140
    $region4: #{tpu_custom_call.1} parent=1 // loop_header_branch
      %21 = sbr.rel (%p19) target = $region8
    $region5: #{tpu_custom_call.1} parent=1 // loop_body
      %s23 = ssub.s32 %s18, 1
      %s24 = ssub.s32 %s18, 2
      %s31 = sadd.s32 1, %s26
      %p32 = scmp.ge.s32.totalorder %s31, 1
      %s33 = scalar_select %p32, 0, %s31
      %s34 = sadd.s32 1, %s25
      %s35 = scalar_select %p32, %s34, %s25
      %p36 = scmp.ge.s32.totalorder %s35, 2
      %s37 = scalar_select %p36, 0, %s35
      %s38 = sadd.s32 %s25, %s26
      %p39 = scmp.lt.s32.totalorder %s38, 0
      %s40 = scalar_select %p39, %s38, 0
      %s41 = sadd.s32 %s37, %s33
      %p42 = scmp.lt.s32.totalorder %s41, 0
      %s43 = scalar_select %p42, %s41, 0
      %s44 = ssub.s32 %s40, %s43
      %p45 = scmp.eq.s32.totalorder %s44, 0
      %s47 = sadd.s32 %s46, 1
      %s48 = scalar_select %p45, %s46, %s47
      %p51 = pneg %p45
      %p52 = scmp.eq.s32.totalorder %s18, 1
      %p53 = por %p51, %p52
      %p54 = scmp.ne.s32.totalorder %s46, %s49
      %p55 = scmp.eq.s32.totalorder %s18, 0
      %p56 = por %p54, %p55
      %p57 = scmp.ne.s32.totalorder %s46, %s49
      %p58 = scmp.eq.s32.totalorder %s23, 1
      %p59 = por %p57, %p58
      %p60 = scmp.ne.s32.totalorder %s49, %s50
      %p61 = scmp.eq.s32.totalorder %s23, 0
      %p62 = por %p60, %p61
      %p63 = scmp.ne.s32.totalorder %s49, %s50
      %p64 = scmp.eq.s32.totalorder %s24, 1
      %p65 = por %p63, %p64
      %p67 = scmp.ne.s32.totalorder %s50, %s66
      %p68 = scmp.eq.s32.totalorder %s24, 0
      %p69 = por %p67, %p68
      %s70 = sadd.s32 %s25, %s26
      %p71 = scmp.lt.s32.totalorder %s70, 0
      %s72 = scalar_select %p71, %s70, 0
      %s73 = sadd.s32 %s37, %s33
      %p74 = scmp.lt.s32.totalorder %s73, 0
      %s75 = scalar_select %p74, %s73, 0
      %s76 = ssub.s32 %s72, %s75
      %p77 = scmp.eq.s32.totalorder %s76, 0
      %s79 = sadd.s32 %s78, 1
      %s80 = scalar_select %p77, %s78, %s79
      %p83 = pneg %p77
      %p84 = scmp.eq.s32.totalorder %s18, 1
      %p85 = por %p83, %p84
      %p86 = scmp.ne.s32.totalorder %s78, %s81
      %p87 = scmp.eq.s32.totalorder %s18, 0
      %p88 = por %p86, %p87
      %p89 = scmp.ne.s32.totalorder %s78, %s81
      %p90 = scmp.eq.s32.totalorder %s23, 1
      %p91 = por %p89, %p90
      %p92 = scmp.ne.s32.totalorder %s81, %s82
      %p93 = scmp.eq.s32.totalorder %s23, 0
      %p94 = por %p92, %p93
      %p95 = scmp.ne.s32.totalorder %s81, %s82
      %p96 = scmp.eq.s32.totalorder %s24, 1
      %p97 = por %p95, %p96
      %p99 = scmp.ne.s32.totalorder %s82, %s98
      %p100 = scmp.eq.s32.totalorder %s24, 0
      %p101 = por %p99, %p100
      %s102 = sadd.s32 %s25, %s26
      %p103 = scmp.lt.s32.totalorder %s102, 0
      %s104 = scalar_select %p103, %s102, 0
      %s105 = sadd.s32 %s37, %s33
      %p106 = scmp.lt.s32.totalorder %s105, 0
      %s107 = scalar_select %p106, %s105, 0
      %s108 = ssub.s32 %s104, %s107
      %p109 = scmp.eq.s32.totalorder %s108, 0
      %s111 = sadd.s32 %s110, 1
      %s112 = scalar_select %p109, %s110, %s111
      %p115 = pneg %p109
      %p116 = scmp.eq.s32.totalorder %s18, 1
      %p117 = por %p115, %p116
      %p118 = scmp.ne.s32.totalorder %s110, %s113
      %p119 = scmp.eq.s32.totalorder %s18, 0
      %p120 = por %p118, %p119
      %p121 = scmp.ne.s32.totalorder %s110, %s113
      %p122 = scmp.eq.s32.totalorder %s23, 1
      %p123 = por %p121, %p122
      %p124 = scmp.ne.s32.totalorder %s113, %s114
      %p125 = scmp.eq.s32.totalorder %s23, 0
      %p126 = por %p124, %p125
      %p127 = scmp.ne.s32.totalorder %s113, %s114
      %p128 = scmp.eq.s32.totalorder %s24, 1
      %p129 = por %p127, %p128
      %p131 = scmp.ne.s32.totalorder %s114, %s130
      %p132 = scmp.eq.s32.totalorder %s24, 0
      %p133 = por %p131, %p132
      %s134 = ssub.s32 %s25, %s37
      %p135 = scmp.eq.s32.totalorder %s134, 0
      %s137 = sadd.s32 %s136, 1
      %s138 = scalar_select %p135, %s136, %s137
      %p141 = pneg %p135
      %p142 = scmp.eq.s32.totalorder %s18, 1
      %p143 = por %p141, %p142
      %p144 = scmp.ne.s32.totalorder %s136, %s139
      %p145 = scmp.eq.s32.totalorder %s18, 0
      %p146 = por %p144, %p145
      %p147 = scmp.ne.s32.totalorder %s136, %s139
      %p148 = scmp.eq.s32.totalorder %s23, 1
      %p149 = por %p147, %p148
      %p150 = scmp.ne.s32.totalorder %s139, %s140
      %p151 = scmp.eq.s32.totalorder %s23, 0
      %p152 = por %p150, %p151
      %p153 = scmp.ne.s32.totalorder %s139, %s140
      %p154 = scmp.eq.s32.totalorder %s24, 1
      %p155 = por %p153, %p154
      %p157 = scmp.ne.s32.totalorder %s140, %s156
      %p158 = scmp.eq.s32.totalorder %s24, 0
      %p159 = por %p157, %p158
      %p160 = scmp.le.s32.totalorder 1, %s18
      %p161 = scmp.lt.s32.totalorder %s18, 3
      %p162 = pnand %p160, %p161
      %p163 = pneg %p162
      // Predicated region
      $region9: #{tpu_custom_call.1} parent=5 // pred_check
        _
      $region10: #{tpu_custom_call.1} parent=5 // pred_check_branch
        %165 = sbr.rel (%p162) target = $region12
      $region11: #{tpu_custom_call.1} parent=5 // pred_region
        %s166 = ssub.s32 %s18, 1
      $region12: #{tpu_custom_call.1} parent=5 // pred_fallthru
        _
      %p167 = scmp.lt.s32.totalorder %s18, 2
      // Predicated region
      $region13: #{tpu_custom_call.1} parent=5 // pred_check
        %p168 = pneg %p167
      $region14: #{tpu_custom_call.1} parent=5 // pred_check_branch
        %170 = sbr.rel (%p168) target = $region16
      $region15: #{tpu_custom_call.1} parent=5 // pred_region
        // Predicated region
        $region17: #{tpu_custom_call.1} parent=15 // pred_check
          %p171 = pneg %p56
        $region18: #{tpu_custom_call.1} parent=15 // pred_check_branch
          %173 = sbr.rel (%p171) target = $region20
        $region19: #{tpu_custom_call.1} parent=15 // pred_region
          %s174 = sand.u32 %s46, 1
          %s175 = scalar_lea.sflag [#allocation3], %s174
          %s176 = sand.u32 %s46, 1
          %s177 = smul.addr %s176, 8
          %s178 = scalar_lea.vmem [#allocation2], %s177
          %s179 = sadd.s32 %s25, %s26
          %p180 = scmp.lt.s32.totalorder %s179, 0
          %s181 = scalar_select %p180, %s179, 0
          %183 = vsyncadd %s175, 0
          %s184 = smul.addr %s181, 8
          %s185 = scalar_lea.hbm %s0, %s184
          %s187 = sshll.u32 %s185, 4
          %s188 = int_to_ptr.hbm [resolvable:$true] %s187
          %s189 = sshll.u32 %s178, 4
          %s190 = int_to_ptr.vmem [resolvable:$true] %s189
          %192 = dma.hbm_to_vmem [thread:$0]  %s188, 128, %s190, %s175
        $region20: #{tpu_custom_call.1} parent=15 // pred_fallthru
          _
        // Predicated region
        $region21: #{tpu_custom_call.1} parent=15 // pred_check
          %p193 = pneg %p88
        $region22: #{tpu_custom_call.1} parent=15 // pred_check_branch
          %195 = sbr.rel (%p193) target = $region24
        $region23: #{tpu_custom_call.1} parent=15 // pred_region
          %s196 = sand.u32 %s18, 1
          %s197 = scalar_lea.sflag [#allocation6], %s196
          %s198 = sand.u32 %s78, 1
          %s199 = smul.addr %s198, 8
          %s200 = scalar_lea.vmem [#allocation5], %s199
          %s201 = sadd.s32 %s25, %s26
          %p202 = scmp.lt.s32.totalorder %s201, 0
          %s203 = scalar_select %p202, %s201, 0
          %205 = vsyncadd %s197, 0
          %s206 = smul.addr %s203, 8
          %s207 = scalar_lea.hbm %s1, %s206
          %s209 = sshll.u32 %s207, 4
          %s210 = int_to_ptr.hbm [resolvable:$true] %s209
          %s211 = sshll.u32 %s200, 4
          %s212 = int_to_ptr.vmem [resolvable:$true] %s211
          %214 = dma.hbm_to_vmem [thread:$0]  %s210, 128, %s212, %s197
        $region24: #{tpu_custom_call.1} parent=15 // pred_fallthru
          _
        // Predicated region
        $region25: #{tpu_custom_call.1} parent=15 // pred_check
          %p215 = pneg %p120
        $region26: #{tpu_custom_call.1} parent=15 // pred_check_branch
          %217 = sbr.rel (%p215) target = $region28
        $region27: #{tpu_custom_call.1} parent=15 // pred_region
          %s218 = sand.u32 %s18, 1
          %s219 = scalar_lea.sflag [#allocation6], %s218
          %s220 = sand.u32 %s110, 1
          %s221 = smul.addr %s220, 8
          %s222 = scalar_lea.vmem [#allocation7], %s221
          %s223 = sadd.s32 %s25, %s26
          %p224 = scmp.lt.s32.totalorder %s223, 0
          %s225 = scalar_select %p224, %s223, 0
          %227 = vsyncadd %s219, 0
          %s228 = smul.addr %s225, 8
          %s229 = scalar_lea.hbm %s2, %s228
          %s231 = sshll.u32 %s229, 4
          %s232 = int_to_ptr.hbm [resolvable:$true] %s231
          %s233 = sshll.u32 %s222, 4
          %s234 = int_to_ptr.vmem [resolvable:$true] %s233
          %236 = dma.hbm_to_vmem [thread:$0]  %s232, 128, %s234, %s219
        $region28: #{tpu_custom_call.1} parent=15 // pred_fallthru
          _
      $region16: #{tpu_custom_call.1} parent=5 // pred_fallthru
        _
      %p237 = scmp.le.s32.totalorder 1, %s18
      %p238 = scmp.lt.s32.totalorder %s18, 3
      %p239 = pnand %p237, %p238
      %p240 = pneg %p239
      // Predicated region
      $region29: #{tpu_custom_call.1} parent=5 // pred_check
        _
      $region30: #{tpu_custom_call.1} parent=5 // pred_check_branch
        %242 = sbr.rel (%p239) target = $region32
      $region31: #{tpu_custom_call.1} parent=5 // pred_region
        %s243 = ssub.s32 %s18, 1
        %s244 = sand.u32 %s49, 1
        %s245 = scalar_lea.sflag [#allocation3], %s244
        %s246 = sand.u32 %s49, 1
        %s247 = smul.addr %s246, 8
        %s248 = scalar_lea.vmem [#allocation2], %s247
        // Predicated region
        $region33: #{tpu_custom_call.1} parent=31 // pred_check
          %p249 = pneg %p62
        $region34: #{tpu_custom_call.1} parent=31 // pred_check_branch
          %251 = sbr.rel (%p249) target = $region36
        $region35: #{tpu_custom_call.1} parent=31 // pred_region
          %253 = dma.done %s245, 128
        $region36: #{tpu_custom_call.1} parent=31 // pred_fallthru
          _
        %s254 = sand.u32 %s23, 1
        %s255 = scalar_lea.sflag [#allocation6], %s254
        %s256 = sand.u32 %s81, 1
        %s257 = smul.addr %s256, 8
        %s258 = scalar_lea.vmem [#allocation5], %s257
        // Predicated region
        $region37: #{tpu_custom_call.1} parent=31 // pred_check
          %p259 = pneg %p94
        $region38: #{tpu_custom_call.1} parent=31 // pred_check_branch
          %261 = sbr.rel (%p259) target = $region40
        $region39: #{tpu_custom_call.1} parent=31 // pred_region
          %263 = dma.done %s255, 128
        $region40: #{tpu_custom_call.1} parent=31 // pred_fallthru
          _
        %s264 = sand.u32 %s23, 1
        %s265 = scalar_lea.sflag [#allocation6], %s264
        %s266 = sand.u32 %s113, 1
        %s267 = smul.addr %s266, 8
        %s268 = scalar_lea.vmem [#allocation7], %s267
        // Predicated region
        $region41: #{tpu_custom_call.1} parent=31 // pred_check
          %p269 = pneg %p126
        $region42: #{tpu_custom_call.1} parent=31 // pred_check_branch
          %271 = sbr.rel (%p269) target = $region44
        $region43: #{tpu_custom_call.1} parent=31 // pred_region
          %273 = dma.done %s265, 128
        $region44: #{tpu_custom_call.1} parent=31 // pred_fallthru
          _
        %s274 = sand.u32 %s49, 1
        %s275 = scalar_lea.sflag [#allocation3], %s274
        %s276 = sand.u32 %s49, 1
        %s277 = smul.addr %s276, 8
        %s278 = scalar_lea.vmem [#allocation2], %s277
        %p279 = pneg %p62
        %p280 = pneg %p59
        %s281 = sand.u32 %s23, 1
        %s282 = scalar_lea.sflag [#allocation6], %s281
        %s283 = sand.u32 %s81, 1
        %s284 = smul.addr %s283, 8
        %s285 = scalar_lea.vmem [#allocation5], %s284
        %p286 = pneg %p94
        %p287 = pneg %p91
        %s288 = sand.u32 %s23, 1
        %s289 = scalar_lea.sflag [#allocation6], %s288
        %s290 = sand.u32 %s113, 1
        %s291 = smul.addr %s290, 8
        %s292 = scalar_lea.vmem [#allocation7], %s291
        %p293 = pneg %p126
        %p294 = pneg %p123
        %p295 = pneg %p152
        %p296 = pneg %p149
        %s297 = sand.u32 %s139, 1
        %s298 = scalar_lea.sflag [#allocation4], %s297
        %s299 = sand.u32 %s139, 1
        %s300 = smul.addr %s299, 8
        %s301 = scalar_lea.vmem [#allocation8], %s300
        %s302 = sadd.s32 %s27, %s28
        %p303 = scmp.lt.s32.totalorder %s302, 0
        %s304 = scalar_select %p303, %s302, 0
        %s305 = sadd.s32 %s27, %s28
        %p306 = scmp.lt.s32.totalorder %s305, 0
        %s307 = scalar_select %p306, %s305, 0
        %s308 = sadd.s32 %s27, %s28
        %p309 = scmp.lt.s32.totalorder %s308, 0
        %s310 = scalar_select %p309, %s308, 0
        %p311 = scmp.eq.s32.totalorder %s28, 0
        // Predicated region
        $region45: #{tpu_custom_call.1} parent=31 // pred_check
          %p312 = pneg %p311
        $region46: #{tpu_custom_call.1} parent=31 // pred_check_branch
          %314 = sbr.rel (%p312) target = $region48
        $region47: #{tpu_custom_call.1} parent=31 // pred_region
          %315 = vst [vmem:[%s301] sm:$0xff] 0.0
        $region48: #{tpu_custom_call.1} parent=31 // pred_fallthru
          _
        %v316 = vld [vmem:[%s248] sm:$0xff]
        %v317 = vld [vmem:[%s258] sm:$0xff]
        %v318 = vld [vmem:[%s268] sm:$0xff]
        %v319 = vsub.f32 %v318, %v317
        %v320 = vsub.f32 %v316, %v317
        %v321 = vsub.f32 %v316, %v318
        %v322 = vadd.f32 %v320, %v321
        %v323 = vmul.f32 %v319, %v322
        %vm324 = vcmask 261120
        %v325 = vsel %vm324, %v323, 0.0
        %326 = vadd.xlane.f32.xlu0 %v325
        %v327 = vpop.xlane.xlu0 %326
        %v328 = vadd.f32 %v327, 0.3
        %v329 = vmax.f32 %v328, 0.0
        %s330 = sadd.s32 %s27, %s28
        %s331 = smul.u32 %s330, 8
        %v332 = vlaneseq
        %v333 = vshrl.u32 %v332, 7
        %v334 = vstv %s331
        %v335 = vadd.s32 %v334, %v333
        %vm336 = vcmp.lt.s32.totalorder %v335, 8
        %v337 = vsel %vm336, %v329, 0.0
        %v338 = vld [vmem:[%s301] sm:$0xff]
        %v339 = vrot.slane %v337, 4
        %v340 = vadd.f32 %v337, %v339
        %v341 = vrot.slane %v340, 2
        %v342 = vadd.f32 %v340, %v341
        %v343 = vrot.slane %v342, 1
        %v344 = vadd.f32 %v342, %v343
        %v345 = vadd.f32 %v338, %v344
        %346 = vst [vmem:[%s301] sm:$0xff] %v345
        %s347 = sand.u32 %s139, 1
        %s348 = scalar_lea.sflag [#allocation4], %s347
        %s349 = sand.u32 %s139, 1
        %s350 = smul.addr %s349, 8
        %s351 = scalar_lea.vmem [#allocation8], %s350
        // Predicated region
        $region49: #{tpu_custom_call.1} parent=31 // pred_check
          %p352 = pneg %p149
        $region50: #{tpu_custom_call.1} parent=31 // pred_check_branch
          %354 = sbr.rel (%p352) target = $region52
        $region51: #{tpu_custom_call.1} parent=31 // pred_region
          %356 = vsyncadd %s348, 0
          %s357 = smul.addr %s27, 8
          %s358 = scalar_lea.hbm %s3, %s357
          %s360 = sshll.u32 %s351, 4
          %s361 = int_to_ptr.vmem [resolvable:$true] %s360
          %s362 = sshll.u32 %s358, 4
          %s363 = int_to_ptr.hbm [resolvable:$true] %s362
          %365 = dma.vmem_to_hbm [thread:$0]  %s361, 128, %s363, %s348
        $region52: #{tpu_custom_call.1} parent=31 // pred_fallthru
          _
      $region32: #{tpu_custom_call.1} parent=5 // pred_fallthru
        _
      %p366 = scmp.le.s32.totalorder 2, %s18
      // Predicated region
      $region53: #{tpu_custom_call.1} parent=5 // pred_check
        %p367 = pneg %p366
      $region54: #{tpu_custom_call.1} parent=5 // pred_check_branch
        %369 = sbr.rel (%p367) target = $region56
      $region55: #{tpu_custom_call.1} parent=5 // pred_region
        %s370 = ssub.s32 %s18, 2
        // Predicated region
        $region57: #{tpu_custom_call.1} parent=55 // pred_check
          %p371 = pneg %p155
        $region58: #{tpu_custom_call.1} parent=55 // pred_check_branch
          %373 = sbr.rel (%p371) target = $region60
        $region59: #{tpu_custom_call.1} parent=55 // pred_region
          %s374 = sand.u32 %s140, 1
          %s375 = scalar_lea.sflag [#allocation4], %s374
          %s376 = sand.u32 %s140, 1
          %s377 = smul.addr %s376, 8
          %s378 = scalar_lea.vmem [#allocation8], %s377
          %380 = dma.done %s375, 128
        $region60: #{tpu_custom_call.1} parent=55 // pred_fallthru
          _
      $region56: #{tpu_custom_call.1} parent=5 // pred_fallthru
        _
    $region6: #{tpu_custom_call.1} parent=1 // loop_footer
      %s22 = sadd.s32 1, %s18
    $region7: #{tpu_custom_call.1} parent=1 // loop_footer_branch
      %17 = sbr.rel target = $region3
    $region8: #{tpu_custom_call.1} parent=1 // loop_exit
      _
    %381 = vsyncpa [#allocation3], 1
    %s382 = scalar_lea.sflag [#allocation3], 1
    %383 = vsyncpa %s382, 1
    %384 = vsyncpa [#allocation6], 1
    %s385 = scalar_lea.sflag [#allocation6], 1
    %386 = vsyncpa %s385, 1
    %387 = vsyncpa [#allocation4], 1
    %s388 = scalar_lea.sflag [#allocation4], 1
    %389 = vsyncpa %s388, 1

</llo_original>
